<compile_context>
chip_gen: v5e
topology: v5e:2x2
jax: 0.10.0
libtpu: 0.0.40
codegen_flags: <defaults>
</compile_context>

<pallas_src>
import functools

import jax
import jax.numpy as jnp
from jax import lax
from jax.experimental import pallas as pl
from jax.experimental.pallas import tpu as pltpu

EPS = 1e-6


def _round_up(a, b):
    return (a + b - 1) // b * b


def _sublane(dtype):
    # rows-per-vreg for the second-minor axis (f32: 8, bf16: 16, int8/fp8: 32)
    return {4: 8, 2: 16, 1: 32}.get(jnp.dtype(dtype).itemsize, 8)


def _default_tm(M, dtype):
    sub = _sublane(dtype)
    if M <= 512:
        # small problem: one tile covering all (padded) rows
        return _round_up(M, sub)
    # Large problems: 512-row tile — multiple of 256 (fills the 2x256 MXU on
    # v6e/v7x, 128-aligned for v5e), ~85% of HBM roofline per measured Pallas
    # tiling data, and guarantees >=2 grid steps so both v7x TensorCores work.
    return 512


def _fused_layernorm_last(h, g, b):
    # Single-reduction-pass LN over the last axis, biased variance + eps,
    # identical semantics to F.layer_norm (channels_last).
    mu = jnp.mean(h, axis=-1, keepdims=True)
    ms = jnp.mean(h * h, axis=-1, keepdims=True)
    var = jnp.maximum(ms - mu * mu, 0.0)
    return (h - mu) * lax.rsqrt(var + EPS) * g + b


def block_kernel(x_ref,
                 w1_ref, b1_ref, g1_ref, be1_ref,
                 w2_ref, b2_ref, g2_ref, be2_ref,
                 w3_ref, b3_ref, gamma_ref,
                 o_ref):
    f32 = jnp.float32
    mm_dtype = w1_ref.dtype            # bf16 weights -> bf16 MXU operands
    x = x_ref[...]                     # (tm, dim), native dtype

    # Linear 1: dim -> hid   (MXU, f32 accumulation)
    h = jnp.dot(x.astype(mm_dtype), w1_ref[...], preferred_element_type=f32)
    h = h + b1_ref[...].astype(f32)
    h = _fused_layernorm_last(h, g1_ref[...].astype(f32), be1_ref[...].astype(f32))
    h = jnp.maximum(h, 0.0)

    # Linear 2: hid -> hid
    h = jnp.dot(h.astype(mm_dtype), w2_ref[...], preferred_element_type=f32)
    h = h + b2_ref[...].astype(f32)
    h = _fused_layernorm_last(h, g2_ref[...].astype(f32), be2_ref[...].astype(f32))
    h = jnp.maximum(h, 0.0)

    # Linear 3: hid -> dim
    y = jnp.dot(h.astype(mm_dtype), w3_ref[...], preferred_element_type=f32)
    y = y + b3_ref[...].astype(f32)

    # layer scale, residual add, final ReLU (drop_path == Identity)
    y = gamma_ref[...].astype(f32) * y + x.astype(f32)
    o_ref[...] = jnp.maximum(y, 0.0).astype(o_ref.dtype)


@functools.partial(jax.jit, static_argnames=("tm",))
def block_forward(x, params, *, tm=None):
    """x: (B, N, dim) channels_last.  params: dict of weights (see init_params)."""
    B, N, dim = x.shape
    assert dim % 4 == 0
    hid = dim // 4
    M = B * N

    if tm is None:
        tm = _default_tm(M, x.dtype)
    sub = _sublane(x.dtype)
    assert tm % sub == 0, f"tm={tm} must be a multiple of the sublane count {sub}"

    # Pad rows to a tile multiple (padded rows are sliced off afterwards).
    Mp = _round_up(M, tm)
    x2 = x.reshape(M, dim)
    if Mp != M:
        x2 = jnp.pad(x2, ((0, Mp - M), (0, 0)))
    # TODO(synk): when dim % 128 != 0, pad the feature axis (with LN masking)
    # for lane-dense stores; here the feature axis is kept at the model dim.

    # (1, C) views so the channel axis is the lane axis.
    b1 = params["b1"].reshape(1, hid)
    g1 = params["g1"].reshape(1, hid)
    be1 = params["be1"].reshape(1, hid)
    b2 = params["b2"].reshape(1, hid)
    g2 = params["g2"].reshape(1, hid)
    be2 = params["be2"].reshape(1, hid)
    b3 = params["b3"].reshape(1, dim)
    gamma = params["gamma"].reshape(1, dim)

    # Constant operands: constant index_map + single VMEM buffer.
    def const_spec(shape):
        return pl.BlockSpec(shape, lambda i: (0, 0), pipeline_mode=pl.Buffered(1))

    io_spec = pl.BlockSpec((tm, dim), lambda i: (i, 0))

    # VMEM budget: single-buffered constants + double-buffered (tm, dim) in/out
    # tiles, plus headroom for LN temporaries and compiler scratch.
    bpe_x = jnp.dtype(x.dtype).itemsize
    bpe_w = jnp.dtype(params["w1"].dtype).itemsize
    bpe_v = jnp.dtype(params["b1"].dtype).itemsize
    const_bytes = (dim * hid + hid * hid + hid * dim) * bpe_w \
        + (4 * hid + 2 * dim) * bpe_v
    io_bytes = 2 * 2 * tm * dim * bpe_x              # 2 buffers each for in/out
    vmem_limit = int(1.5 * (const_bytes + io_bytes)) + (8 << 20)
    vmem_limit = max(16 << 20, min(vmem_limit, 128 << 20))

    out = pl.pallas_call(
        block_kernel,
        out_shape=jax.ShapeDtypeStruct((Mp, dim), x.dtype),
        grid_spec=pltpu.PrefetchScalarGridSpec(
            num_scalar_prefetch=0,
            grid=(Mp // tm,),
            in_specs=[
                io_spec,                                          # x rows
                const_spec((dim, hid)), const_spec((1, hid)),     # w1, b1
                const_spec((1, hid)), const_spec((1, hid)),       # g1, be1
                const_spec((hid, hid)), const_spec((1, hid)),     # w2, b2
                const_spec((1, hid)), const_spec((1, hid)),       # g2, be2
                const_spec((hid, dim)), const_spec((1, dim)),     # w3, b3
                const_spec((1, dim)),                             # gamma
            ],
            out_specs=io_spec,
        ),
        compiler_params=pltpu.CompilerParams(
            dimension_semantics=("parallel",),
            vmem_limit_bytes=vmem_limit),
    )(x2,
      params["w1"], b1, g1, be1,
      params["w2"], b2, g2, be2,
      params["w3"], b3, gamma)

    if Mp != M:
        out = out[:M]
    return out.reshape(B, N, dim)


def init_params(key, dim, layer_scale_init_value=1e-6, dtype=jnp.float32):
    """Deterministic synthetic init matching the PyTorch module's shapes.

    PyTorch nn.Linear stores weight as (out, in); we store the transpose
    (in, out) so the kernel computes y = x @ W + b directly.
    """
    hid = dim // 4
    ks = jax.random.split(key, 6)
    scale1 = 1.0 / jnp.sqrt(dim)
    scale2 = 1.0 / jnp.sqrt(hid)
    return {
        "w1": jax.random.normal(ks[0], (dim, hid), dtype) * jnp.asarray(scale1, dtype),
        "b1": jax.random.normal(ks[1], (hid,), dtype) * jnp.asarray(scale1, dtype),
        "g1": jnp.ones((hid,), dtype),
        "be1": jnp.zeros((hid,), dtype),
        "w2": jax.random.normal(ks[2], (hid, hid), dtype) * jnp.asarray(scale2, dtype),
        "b2": jax.random.normal(ks[3], (hid,), dtype) * jnp.asarray(scale2, dtype),
        "g2": jnp.ones((hid,), dtype),
        "be2": jnp.zeros((hid,), dtype),
        "w3": jax.random.normal(ks[4], (hid, dim), dtype) * jnp.asarray(scale2, dtype),
        "b3": jax.random.normal(ks[5], (dim,), dtype) * jnp.asarray(scale2, dtype),
        "gamma": jnp.full((dim,), layer_scale_init_value, dtype),
    }


def block_forward_ref(x, params):
    """Pure-JAX reference (mirrors the PyTorch forward, f32 math)."""
    def ln(h, g, b):
        mu = jnp.mean(h, axis=-1, keepdims=True)
        var = jnp.mean((h - mu) ** 2, axis=-1, keepdims=True)
        return (h - mu) / jnp.sqrt(var + EPS) * g + b

    h = x @ params["w1"] + params["b1"]
    h = jnp.maximum(ln(h, params["g1"], params["be1"]), 0.0)
    h = h @ params["w2"] + params["b2"]
    h = jnp.maximum(ln(h, params["g2"], params["be2"]), 0.0)
    y = h @ params["w3"] + params["b3"]
    y = params["gamma"] * y
    return jnp.maximum(x + y, 0.0)


if __name__ == "__main__":
    key = jax.random.PRNGKey(0)
    kx, kp = jax.random.split(key)

    B, N, dim = 2, 8, 32          # dim // 4 == 8 hidden
    x = jax.random.normal(kx, (B, N, dim), jnp.float32)
    params = init_params(kp, dim, dtype=jnp.float32)

    # f32 path vs reference (tight tolerance)
    out = jax.block_until_ready(block_forward(x, params))
    ref = block_forward_ref(x, params)
    assert out.shape == (B, N, dim)
    assert jnp.allclose(out, ref, atol=1e-5, rtol=1e-5), "f32 mismatch vs reference"

    # bf16 operands (f32 accumulation in-kernel): the fast path on v6e/v7x MXUs.
    xb = x.astype(jnp.bfloat16)
    pb = {k: v.astype(jnp.bfloat16) for k, v in params.items()}
    outb = jax.block_until_ready(block_forward(xb, pb))
    refb = block_forward_ref(xb.astype(jnp.float32),
                             {k: v.astype(jnp.float32) for k, v in pb.items()})
    assert jnp.allclose(outb.astype(jnp.float32), refb, atol=5e-2, rtol=5e-2), \
        "bf16 mismatch vs reference"

    print("KERNEL_OK")
</pallas_src>

<mosaic_0001>
module attributes {stable_mosaic.version = 11 : i64} {
  func.func @block_kernel(%arg0: i32, %arg1: memref<16x32xf32, #tpu.memory_space<vmem>>, %arg2: memref<32x8xf32, #tpu.memory_space<vmem>>, %arg3: memref<1x8xf32, #tpu.memory_space<vmem>>, %arg4: memref<1x8xf32, #tpu.memory_space<vmem>>, %arg5: memref<1x8xf32, #tpu.memory_space<vmem>>, %arg6: memref<8x8xf32, #tpu.memory_space<vmem>>, %arg7: memref<1x8xf32, #tpu.memory_space<vmem>>, %arg8: memref<1x8xf32, #tpu.memory_space<vmem>>, %arg9: memref<1x8xf32, #tpu.memory_space<vmem>>, %arg10: memref<8x32xf32, #tpu.memory_space<vmem>>, %arg11: memref<1x32xf32, #tpu.memory_space<vmem>>, %arg12: memref<1x32xf32, #tpu.memory_space<vmem>>, %arg13: memref<16x32xf32, #tpu.memory_space<vmem>>) attributes {dimension_semantics = [#tpu.dimension_semantics<parallel>], iteration_bounds = array<i64: 1>, scalar_prefetch = 0 : i64, scratch_operands = 0 : i64, tpu.core_type = #tpu.core_type<tc>, window_params = [{transform_indices = @transform_0, window_bounds = array<i64: 16, 32>}, {pipeline_mode = #tpu.pipeline_mode<synchronous>, transform_indices = @transform_1, window_bounds = array<i64: 32, 8>}, {pipeline_mode = #tpu.pipeline_mode<synchronous>, transform_indices = @transform_2, window_bounds = array<i64: 1, 8>}, {pipeline_mode = #tpu.pipeline_mode<synchronous>, transform_indices = @transform_3, window_bounds = array<i64: 1, 8>}, {pipeline_mode = #tpu.pipeline_mode<synchronous>, transform_indices = @transform_4, window_bounds = array<i64: 1, 8>}, {pipeline_mode = #tpu.pipeline_mode<synchronous>, transform_indices = @transform_5, window_bounds = array<i64: 8, 8>}, {pipeline_mode = #tpu.pipeline_mode<synchronous>, transform_indices = @transform_6, window_bounds = array<i64: 1, 8>}, {pipeline_mode = #tpu.pipeline_mode<synchronous>, transform_indices = @transform_7, window_bounds = array<i64: 1, 8>}, {pipeline_mode = #tpu.pipeline_mode<synchronous>, transform_indices = @transform_8, window_bounds = array<i64: 1, 8>}, {pipeline_mode = #tpu.pipeline_mode<synchronous>, transform_indices = @transform_9, window_bounds = array<i64: 8, 32>}, {pipeline_mode = #tpu.pipeline_mode<synchronous>, transform_indices = @transform_10, window_bounds = array<i64: 1, 32>}, {pipeline_mode = #tpu.pipeline_mode<synchronous>, transform_indices = @transform_11, window_bounds = array<i64: 1, 32>}, {transform_indices = @transform_12, window_bounds = array<i64: 16, 32>}]} {
    %c0 = arith.constant 0 : index
    %c0_0 = arith.constant 0 : index
    %0 = vector.load %arg1[%c0, %c0_0] : memref<16x32xf32, #tpu.memory_space<vmem>>, vector<16x32xf32>
    %c0_1 = arith.constant 0 : index
    %c0_2 = arith.constant 0 : index
    %1 = vector.load %arg2[%c0_1, %c0_2] : memref<32x8xf32, #tpu.memory_space<vmem>>, vector<32x8xf32>
    %cst = arith.constant dense<0.000000e+00> : vector<16x8xf32>
    %2 = tpu.matmul %0, %1, %cst {dimension_numbers = #tpu.dot_dimension_numbers<[1], [0], [0], [1], [0, 0, 1, 1], [], []>} : vector<16x32xf32>, vector<32x8xf32>, vector<16x8xf32> -> vector<16x8xf32>
    %c0_3 = arith.constant 0 : index
    %c0_4 = arith.constant 0 : index
    %3 = vector.load %arg3[%c0_3, %c0_4] : memref<1x8xf32, #tpu.memory_space<vmem>>, vector<1x8xf32>
    %4 = vector.broadcast %3 : vector<1x8xf32> to vector<16x8xf32>
    %5 = arith.addf %2, %4 : vector<16x8xf32>
    %c0_5 = arith.constant 0 : index
    %c0_6 = arith.constant 0 : index
    %6 = vector.load %arg4[%c0_5, %c0_6] : memref<1x8xf32, #tpu.memory_space<vmem>>, vector<1x8xf32>
    %c0_7 = arith.constant 0 : index
    %c0_8 = arith.constant 0 : index
    %7 = vector.load %arg5[%c0_7, %c0_8] : memref<1x8xf32, #tpu.memory_space<vmem>>, vector<1x8xf32>
    %cst_9 = arith.constant dense<0.000000e+00> : vector<16xf32>
    %8 = vector.multi_reduction <add>, %5, %cst_9 [1] : vector<16x8xf32> to vector<16xf32>
    %9 = vector.shape_cast %8 : vector<16xf32> to vector<16x1xf32>
    %cst_10 = arith.constant 8.000000e+00 : f32
    %10 = vector.broadcast %cst_10 : f32 to vector<16x1xf32>
    %11 = arith.divf %9, %10 : vector<16x1xf32>
    %12 = arith.mulf %5, %5 : vector<16x8xf32>
    %cst_11 = arith.constant dense<0.000000e+00> : vector<16xf32>
    %13 = vector.multi_reduction <add>, %12, %cst_11 [1] : vector<16x8xf32> to vector<16xf32>
    %14 = vector.shape_cast %13 : vector<16xf32> to vector<16x1xf32>
    %cst_12 = arith.constant 8.000000e+00 : f32
    %15 = vector.broadcast %cst_12 : f32 to vector<16x1xf32>
    %16 = arith.divf %14, %15 : vector<16x1xf32>
    %17 = arith.mulf %11, %11 : vector<16x1xf32>
    %18 = arith.subf %16, %17 : vector<16x1xf32>
    %cst_13 = arith.constant 0.000000e+00 : f32
    %19 = vector.broadcast %cst_13 : f32 to vector<16x1xf32>
    %20 = arith.maximumf %18, %19 : vector<16x1xf32>
    %21 = vector.broadcast %11 : vector<16x1xf32> to vector<16x8xf32>
    %22 = arith.subf %5, %21 : vector<16x8xf32>
    %cst_14 = arith.constant 9.99999997E-7 : f32
    %23 = vector.broadcast %cst_14 : f32 to vector<16x1xf32>
    %24 = arith.addf %20, %23 : vector<16x1xf32>
    %25 = math.rsqrt %24 : vector<16x1xf32>
    %26 = vector.broadcast %25 : vector<16x1xf32> to vector<16x8xf32>
    %27 = arith.mulf %22, %26 : vector<16x8xf32>
    %28 = vector.broadcast %6 : vector<1x8xf32> to vector<16x8xf32>
    %29 = arith.mulf %27, %28 : vector<16x8xf32>
    %30 = vector.broadcast %7 : vector<1x8xf32> to vector<16x8xf32>
    %31 = arith.addf %29, %30 : vector<16x8xf32>
    %cst_15 = arith.constant 0.000000e+00 : f32
    %32 = vector.broadcast %cst_15 : f32 to vector<16x8xf32>
    %33 = arith.maximumf %31, %32 : vector<16x8xf32>
    %c0_16 = arith.constant 0 : index
    %c0_17 = arith.constant 0 : index
    %34 = vector.load %arg6[%c0_16, %c0_17] : memref<8x8xf32, #tpu.memory_space<vmem>>, vector<8x8xf32>
    %cst_18 = arith.constant dense<0.000000e+00> : vector<16x8xf32>
    %35 = tpu.matmul %33, %34, %cst_18 {dimension_numbers = #tpu.dot_dimension_numbers<[1], [0], [0], [1], [0, 0, 1, 1], [], []>} : vector<16x8xf32>, vector<8x8xf32>, vector<16x8xf32> -> vector<16x8xf32>
    %c0_19 = arith.constant 0 : index
    %c0_20 = arith.constant 0 : index
    %36 = vector.load %arg7[%c0_19, %c0_20] : memref<1x8xf32, #tpu.memory_space<vmem>>, vector<1x8xf32>
    %37 = vector.broadcast %36 : vector<1x8xf32> to vector<16x8xf32>
    %38 = arith.addf %35, %37 : vector<16x8xf32>
    %c0_21 = arith.constant 0 : index
    %c0_22 = arith.constant 0 : index
    %39 = vector.load %arg8[%c0_21, %c0_22] : memref<1x8xf32, #tpu.memory_space<vmem>>, vector<1x8xf32>
    %c0_23 = arith.constant 0 : index
    %c0_24 = arith.constant 0 : index
    %40 = vector.load %arg9[%c0_23, %c0_24] : memref<1x8xf32, #tpu.memory_space<vmem>>, vector<1x8xf32>
    %cst_25 = arith.constant dense<0.000000e+00> : vector<16xf32>
    %41 = vector.multi_reduction <add>, %38, %cst_25 [1] : vector<16x8xf32> to vector<16xf32>
    %42 = vector.shape_cast %41 : vector<16xf32> to vector<16x1xf32>
    %cst_26 = arith.constant 8.000000e+00 : f32
    %43 = vector.broadcast %cst_26 : f32 to vector<16x1xf32>
    %44 = arith.divf %42, %43 : vector<16x1xf32>
    %45 = arith.mulf %38, %38 : vector<16x8xf32>
    %cst_27 = arith.constant dense<0.000000e+00> : vector<16xf32>
    %46 = vector.multi_reduction <add>, %45, %cst_27 [1] : vector<16x8xf32> to vector<16xf32>
    %47 = vector.shape_cast %46 : vector<16xf32> to vector<16x1xf32>
    %cst_28 = arith.constant 8.000000e+00 : f32
    %48 = vector.broadcast %cst_28 : f32 to vector<16x1xf32>
    %49 = arith.divf %47, %48 : vector<16x1xf32>
    %50 = arith.mulf %44, %44 : vector<16x1xf32>
    %51 = arith.subf %49, %50 : vector<16x1xf32>
    %cst_29 = arith.constant 0.000000e+00 : f32
    %52 = vector.broadcast %cst_29 : f32 to vector<16x1xf32>
    %53 = arith.maximumf %51, %52 : vector<16x1xf32>
    %54 = vector.broadcast %44 : vector<16x1xf32> to vector<16x8xf32>
    %55 = arith.subf %38, %54 : vector<16x8xf32>
    %cst_30 = arith.constant 9.99999997E-7 : f32
    %56 = vector.broadcast %cst_30 : f32 to vector<16x1xf32>
    %57 = arith.addf %53, %56 : vector<16x1xf32>
    %58 = math.rsqrt %57 : vector<16x1xf32>
    %59 = vector.broadcast %58 : vector<16x1xf32> to vector<16x8xf32>
    %60 = arith.mulf %55, %59 : vector<16x8xf32>
    %61 = vector.broadcast %39 : vector<1x8xf32> to vector<16x8xf32>
    %62 = arith.mulf %60, %61 : vector<16x8xf32>
    %63 = vector.broadcast %40 : vector<1x8xf32> to vector<16x8xf32>
    %64 = arith.addf %62, %63 : vector<16x8xf32>
    %cst_31 = arith.constant 0.000000e+00 : f32
    %65 = vector.broadcast %cst_31 : f32 to vector<16x8xf32>
    %66 = arith.maximumf %64, %65 : vector<16x8xf32>
    %c0_32 = arith.constant 0 : index
    %c0_33 = arith.constant 0 : index
    %67 = vector.load %arg10[%c0_32, %c0_33] : memref<8x32xf32, #tpu.memory_space<vmem>>, vector<8x32xf32>
    %cst_34 = arith.constant dense<0.000000e+00> : vector<16x32xf32>
    %68 = tpu.matmul %66, %67, %cst_34 {dimension_numbers = #tpu.dot_dimension_numbers<[1], [0], [0], [1], [0, 0, 1, 1], [], []>} : vector<16x8xf32>, vector<8x32xf32>, vector<16x32xf32> -> vector<16x32xf32>
    %c0_35 = arith.constant 0 : index
    %c0_36 = arith.constant 0 : index
    %69 = vector.load %arg11[%c0_35, %c0_36] : memref<1x32xf32, #tpu.memory_space<vmem>>, vector<1x32xf32>
    %70 = vector.broadcast %69 : vector<1x32xf32> to vector<16x32xf32>
    %71 = arith.addf %68, %70 : vector<16x32xf32>
    %c0_37 = arith.constant 0 : index
    %c0_38 = arith.constant 0 : index
    %72 = vector.load %arg12[%c0_37, %c0_38] : memref<1x32xf32, #tpu.memory_space<vmem>>, vector<1x32xf32>
    %73 = vector.broadcast %72 : vector<1x32xf32> to vector<16x32xf32>
    %74 = arith.mulf %73, %71 : vector<16x32xf32>
    %75 = arith.addf %74, %0 : vector<16x32xf32>
    %cst_39 = arith.constant 0.000000e+00 : f32
    %76 = vector.broadcast %cst_39 : f32 to vector<16x32xf32>
    %77 = arith.maximumf %75, %76 : vector<16x32xf32>
    %c0_40 = arith.constant 0 : index
    %c0_41 = arith.constant 0 : index
    %78 = vector.load %arg13[%c0_40, %c0_41] : memref<16x32xf32, #tpu.memory_space<vmem>>, vector<16x32xf32>
    tpu.vector_store %arg13[%c0_40, %c0_41], %77 {strides = array<i32>} : memref<16x32xf32, #tpu.memory_space<vmem>>, vector<16x32xf32>,
    return
  }
  func.func @transform_0(%arg0: i32) -> (i32, i32) {
    %c0_i32 = arith.constant 0 : i32
    %c0_i32_0 = arith.constant 0 : i32
    return %arg0, %c0_i32 : i32, i32
  }
  func.func @transform_1(%arg0: i32) -> (i32, i32) {
    %c0_i32 = arith.constant 0 : i32
    %c0_i32_0 = arith.constant 0 : i32
    %c0_i32_1 = arith.constant 0 : i32
    return %c0_i32, %c0_i32_0 : i32, i32
  }
  func.func @transform_2(%arg0: i32) -> (i32, i32) {
    %c0_i32 = arith.constant 0 : i32
    %c0_i32_0 = arith.constant 0 : i32
    %c0_i32_1 = arith.constant 0 : i32
    return %c0_i32, %c0_i32_0 : i32, i32
  }
  func.func @transform_3(%arg0: i32) -> (i32, i32) {
    %c0_i32 = arith.constant 0 : i32
    %c0_i32_0 = arith.constant 0 : i32
    %c0_i32_1 = arith.constant 0 : i32
    return %c0_i32, %c0_i32_0 : i32, i32
  }
  func.func @transform_4(%arg0: i32) -> (i32, i32) {
    %c0_i32 = arith.constant 0 : i32
    %c0_i32_0 = arith.constant 0 : i32
    %c0_i32_1 = arith.constant 0 : i32
    return %c0_i32, %c0_i32_0 : i32, i32
  }
  func.func @transform_5(%arg0: i32) -> (i32, i32) {
    %c0_i32 = arith.constant 0 : i32
    %c0_i32_0 = arith.constant 0 : i32
    %c0_i32_1 = arith.constant 0 : i32
    return %c0_i32, %c0_i32_0 : i32, i32
  }
  func.func @transform_6(%arg0: i32) -> (i32, i32) {
    %c0_i32 = arith.constant 0 : i32
    %c0_i32_0 = arith.constant 0 : i32
    %c0_i32_1 = arith.constant 0 : i32
    return %c0_i32, %c0_i32_0 : i32, i32
  }
  func.func @transform_7(%arg0: i32) -> (i32, i32) {
    %c0_i32 = arith.constant 0 : i32
    %c0_i32_0 = arith.constant 0 : i32
    %c0_i32_1 = arith.constant 0 : i32
    return %c0_i32, %c0_i32_0 : i32, i32
  }
  func.func @transform_8(%arg0: i32) -> (i32, i32) {
    %c0_i32 = arith.constant 0 : i32
    %c0_i32_0 = arith.constant 0 : i32
    %c0_i32_1 = arith.constant 0 : i32
    return %c0_i32, %c0_i32_0 : i32, i32
  }
  func.func @transform_9(%arg0: i32) -> (i32, i32) {
    %c0_i32 = arith.constant 0 : i32
    %c0_i32_0 = arith.constant 0 : i32
    %c0_i32_1 = arith.constant 0 : i32
    return %c0_i32, %c0_i32_0 : i32, i32
  }
  func.func @transform_10(%arg0: i32) -> (i32, i32) {
    %c0_i32 = arith.constant 0 : i32
    %c0_i32_0 = arith.constant 0 : i32
    %c0_i32_1 = arith.constant 0 : i32
    return %c0_i32, %c0_i32_0 : i32, i32
  }
  func.func @transform_11(%arg0: i32) -> (i32, i32) {
    %c0_i32 = arith.constant 0 : i32
    %c0_i32_0 = arith.constant 0 : i32
    %c0_i32_1 = arith.constant 0 : i32
    return %c0_i32, %c0_i32_0 : i32, i32
  }
  func.func @transform_12(%arg0: i32) -> (i32, i32) {
    %c0_i32 = arith.constant 0 : i32
    %c0_i32_0 = arith.constant 0 : i32
    return %arg0, %c0_i32 : i32, i32
  }
}

</mosaic_0001>

<llo_original>
// kernel: block_forward.1
$region0: #{block_forward.1}
  #allocation0 [shape = 'u32[]', space=smem, size = 0x4, offset = 0x4, fixed_abs, tag = 'smem constant byte address 0x4 - core index']
  #allocation1 [shape = 'u32[72,128]{1,0:T(1,128)}', space=vmem, size = 0x9000, scoped, tag = 'internal scratch']
  %s0 = inlined_call_operand.vmem [shape: f32[16,32], index: 0, kind: input, shape index: {}]
  %s1 = inlined_call_operand.vmem [shape: f32[32,8], index: 1, kind: input, shape index: {}]
  %s2 = inlined_call_operand.vmem [shape: f32[1,8], index: 2, kind: input, shape index: {}]
  %s3 = inlined_call_operand.vmem [shape: f32[1,8], index: 3, kind: input, shape index: {}]
  %s4 = inlined_call_operand.vmem [shape: f32[1,8], index: 4, kind: input, shape index: {}]
  %s5 = inlined_call_operand.vmem [shape: f32[8,8], index: 5, kind: input, shape index: {}]
  %s6 = inlined_call_operand.vmem [shape: f32[1,8], index: 6, kind: input, shape index: {}]
  %s7 = inlined_call_operand.vmem [shape: f32[1,8], index: 7, kind: input, shape index: {}]
  %s8 = inlined_call_operand.vmem [shape: f32[1,8], index: 8, kind: input, shape index: {}]
  %s9 = inlined_call_operand.vmem [shape: f32[8,32], index: 9, kind: input, shape index: {}]
  %s10 = inlined_call_operand.vmem [shape: f32[1,32], index: 10, kind: input, shape index: {}]
  %s11 = inlined_call_operand.vmem [shape: f32[1,32], index: 11, kind: input, shape index: {}]
  %s12 = inlined_call_operand.hbm [shape: f32[16,32], index: 12, kind: output, shape index: {}]
  %s13 = sld [smem:[#allocation0]]
  $region58: #{block_forward.1} parent=0
    _
  %s15 = ssub.s32 1, %s13
  %s16 = scalar_select 0, %s15, %s13
  $region1: #{block_forward.1} parent=0
    #allocation2 [shape = 'u8[8192]{0}', space=vmem, size = 0x2000, scoped, tag = 'output window, operand 0, single buffered']
    #allocation3 [shape = 's32[1]{0}', space=sflag, size = 0x4, scoped, tag = 'scoped memory for block_forward.1']
    %17 = vsyncpa [#allocation3], 0
    // Predicated region
    $region2: #{block_forward.1} parent=1 // pred_check
      _
    $region3: #{block_forward.1} parent=1 // pred_check_branch
      %19 = sbr.rel (0) target = $region5
    $region4: #{block_forward.1} parent=1 // pred_region
      _
    $region5: #{block_forward.1} parent=1 // pred_fallthru
      _
    // Predicated region
    $region6: #{block_forward.1} parent=1 // pred_check
      _
    $region7: #{block_forward.1} parent=1 // pred_check_branch
      %21 = sbr.rel (0) target = $region9
    $region8: #{block_forward.1} parent=1 // pred_region
      _
    $region9: #{block_forward.1} parent=1 // pred_fallthru
      _
    // Predicated region
    $region10: #{block_forward.1} parent=1 // pred_check
      _
    $region11: #{block_forward.1} parent=1 // pred_check_branch
      %23 = sbr.rel (0) target = $region13
    $region12: #{block_forward.1} parent=1 // pred_region
      _
    $region13: #{block_forward.1} parent=1 // pred_fallthru
      _
    // Predicated region
    $region14: #{block_forward.1} parent=1 // pred_check
      _
    $region15: #{block_forward.1} parent=1 // pred_check_branch
      %25 = sbr.rel (0) target = $region17
    $region16: #{block_forward.1} parent=1 // pred_region
      _
    $region17: #{block_forward.1} parent=1 // pred_fallthru
      _
    // Predicated region
    $region18: #{block_forward.1} parent=1 // pred_check
      _
    $region19: #{block_forward.1} parent=1 // pred_check_branch
      %27 = sbr.rel (0) target = $region21
    $region20: #{block_forward.1} parent=1 // pred_region
      _
    $region21: #{block_forward.1} parent=1 // pred_fallthru
      _
    // Predicated region
    $region22: #{block_forward.1} parent=1 // pred_check
      _
    $region23: #{block_forward.1} parent=1 // pred_check_branch
      %29 = sbr.rel (0) target = $region25
    $region24: #{block_forward.1} parent=1 // pred_region
      _
    $region25: #{block_forward.1} parent=1 // pred_fallthru
      _
    // Predicated region
    $region26: #{block_forward.1} parent=1 // pred_check
      _
    $region27: #{block_forward.1} parent=1 // pred_check_branch
      %31 = sbr.rel (0) target = $region29
    $region28: #{block_forward.1} parent=1 // pred_region
      _
    $region29: #{block_forward.1} parent=1 // pred_fallthru
      _
    // Predicated region
    $region30: #{block_forward.1} parent=1 // pred_check
      _
    $region31: #{block_forward.1} parent=1 // pred_check_branch
      %33 = sbr.rel (0) target = $region33
    $region32: #{block_forward.1} parent=1 // pred_region
      _
    $region33: #{block_forward.1} parent=1 // pred_fallthru
      _
    // Predicated region
    $region34: #{block_forward.1} parent=1 // pred_check
      _
    $region35: #{block_forward.1} parent=1 // pred_check_branch
      %35 = sbr.rel (0) target = $region37
    $region36: #{block_forward.1} parent=1 // pred_region
      _
    $region37: #{block_forward.1} parent=1 // pred_fallthru
      _
    // Predicated region
    $region38: #{block_forward.1} parent=1 // pred_check
      _
    $region39: #{block_forward.1} parent=1 // pred_check_branch
      %37 = sbr.rel (0) target = $region41
    $region40: #{block_forward.1} parent=1 // pred_region
      _
    $region41: #{block_forward.1} parent=1 // pred_fallthru
      _
    // Predicated region
    $region42: #{block_forward.1} parent=1 // pred_check
      _
    $region43: #{block_forward.1} parent=1 // pred_check_branch
      %39 = sbr.rel (0) target = $region45
    $region44: #{block_forward.1} parent=1 // pred_region
      _
    $region45: #{block_forward.1} parent=1 // pred_fallthru
      _
    // Predicated region
    $region46: #{block_forward.1} parent=1 // pred_check
      _
    $region47: #{block_forward.1} parent=1 // pred_check_branch
      %41 = sbr.rel (0) target = $region49
    $region48: #{block_forward.1} parent=1 // pred_region
      _
    $region49: #{block_forward.1} parent=1 // pred_fallthru
      _
    %v42 = vld [vmem:[%s0] sm:$0xff]
    %v43 = vld [vmem:[%s0 + $0x8] sm:$0xff]
    %v44 = vld [vmem:[%s1] sm:$0xff]
    %v45 = vld [vmem:[%s1 + $0x8] sm:$0xff]
    %v46 = vld [vmem:[%s1 + $0x10] sm:$0xff]
    %v47 = vld [vmem:[%s1 + $0x18] sm:$0xff]
    %v48 = vld [vmem:[%s2] sm:$0x1]
    %v50 = vperm.slane %v48, 0
    %vm52 = vcmask 261120
    %v54 = vsel %vm52, %v42, 0
    %v57 = vsel %vm52, %v43, 0
    %59 = vmatpush.msra.mxu0 0.0
    %60 = vmatpush.msra.mxu0 0.0
    %61 = vmatpush.msra.mxu0 0.0
    %62 = vmatpush.msra.mxu0 0.0
    %63 = vmatpush.msra.mxu0 0.0
    %64 = vmatpush.msra.mxu0 0.0
    %65 = vmatpush.msra.mxu0 0.0
    %66 = vmatpush.msra.mxu0 0.0
    %67 = vmatpush.msra.mxu0 0.0
    %68 = vmatpush.msra.mxu0 0.0
    %69 = vmatpush.msra.mxu0 0.0
    %70 = vmatpush.msra.mxu0 0.0
    %71 = vmatpush.msra.mxu0 %v47
    %72 = vmatpush.msra.mxu0 %v46
    %73 = vmatpush.msra.mxu0 %v45
    %74 = vmatpush.msra.mxu0 %v44
    %75 = vmatmul.f32.gmra.mxu0 %v54
    %v76 = vpop.f32.mrf.mxu0
    %v77 = vadd.f32 %v50, %v76
    %78 = vmatmul.f32.gmra.mxu0 %v57
    %v79 = vpop.f32.mrf.mxu0
    %v80 = vadd.f32 %v50, %v79
    %81 = vdwg.mxu0
    %v82 = vld [vmem:[%s3] sm:$0x1]
    %v83 = vld [vmem:[%s4] sm:$0x1]
    %vm84 = vcmask 64512
    %v85 = vsel %vm84, %v77, 0.0
    %86 = vadd.xlane.f32.xlu0 %v85
    %v87 = vpop.xlane.xlu0 %86
    %v88 = vsel %vm84, %v80, 0.0
    %89 = vadd.xlane.f32.xlu0 %v88
    %v90 = vpop.xlane.xlu0 %89
    %v91 = vrcp.pop 8.0
    %v92 = vmul.f32 8.0, %v91
    %v93 = vsub.f32 1.0, %v92
    %v94 = vmul.f32 %v91, %v93
    %v95 = vadd.f32 %v91, %v94
    %vm96 = vweird.f32 %v91
    %v97 = vsel %vm96, %v91, %v95
    %v98 = vmul.f32 %v87, %v97
    %v99 = vmul.f32 %v90, %v97
    %v100 = vmul.f32 %v77, %v77
    %v101 = vmul.f32 %v80, %v80
    %v102 = vsel %vm84, %v100, 0.0
    %103 = vadd.xlane.f32.xlu0 %v102
    %v104 = vpop.xlane.xlu0 %103
    %v105 = vsel %vm84, %v101, 0.0
    %106 = vadd.xlane.f32.xlu0 %v105
    %v107 = vpop.xlane.xlu0 %106
    %v108 = vmul.f32 %v104, %v97
    %v109 = vmul.f32 %v107, %v97
    %v110 = vmul.f32 %v98, %v98
    %v111 = vmul.f32 %v99, %v99
    %v112 = vsub.f32 %v108, %v110
    %v113 = vsub.f32 %v109, %v111
    %v114 = vmax.f32 %v112, 0.0
    %v115 = vmax.f32 %v113, 0.0
    %v116 = vsub.f32 %v77, %v98
    %v117 = vsub.f32 %v80, %v99
    %v118 = vadd.f32 %v114, 1e-06
    %v119 = vadd.f32 %v115, 1e-06
    %v120 = vrsqrt.pop %v118
    %v121 = vmul.f32 %v120, %v118
    %v122 = vmul.f32 %v121, %v120
    %v123 = vmul.f32 0.5, %v122
    %v124 = vsub.f32 1.5, %v123
    %v125 = vmul.f32 %v120, %v124
    %vm126 = vweird.f32 %v118
    %vm127 = vweird.f32 %v120
    %vm128 = vmor %vm126, %vm127
    %v129 = vsel %vm128, %v120, %v125
    %v130 = vrsqrt.pop %v119
    %v131 = vmul.f32 %v130, %v119
    %v132 = vmul.f32 %v131, %v130
    %v133 = vmul.f32 0.5, %v132
    %v134 = vsub.f32 1.5, %v133
    %v135 = vmul.f32 %v130, %v134
    %vm136 = vweird.f32 %v119
    %vm137 = vweird.f32 %v130
    %vm138 = vmor %vm136, %vm137
    %v139 = vsel %vm138, %v130, %v135
    %v140 = vmul.f32 %v116, %v129
    %v141 = vmul.f32 %v117, %v139
    %v143 = vperm.slane %v82, 0
    %v145 = vmul.f32 %v140, %v143
    %v146 = vmul.f32 %v141, %v143
    %v148 = vperm.slane %v83, 0
    %v150 = vadd.f32 %v145, %v148
    %v151 = vadd.f32 %v146, %v148
    %v152 = vmax.f32 %v150, 0.0
    %v153 = vmax.f32 %v151, 0.0
    %v154 = vld [vmem:[%s5] sm:$0xff]
    %v155 = vld [vmem:[%s6] sm:$0x1]
    %v157 = vperm.slane %v155, 0
    %v160 = vsel %vm84, %v152, 0
    %v163 = vsel %vm84, %v153, 0
    %165 = vmatpush.msra.mxu0 0.0
    %166 = vmatpush.msra.mxu0 0.0
    %167 = vmatpush.msra.mxu0 0.0
    %168 = vmatpush.msra.mxu0 0.0
    %169 = vmatpush.msra.mxu0 0.0
    %170 = vmatpush.msra.mxu0 0.0
    %171 = vmatpush.msra.mxu0 0.0
    %172 = vmatpush.msra.mxu0 0.0
    %173 = vmatpush.msra.mxu0 0.0
    %174 = vmatpush.msra.mxu0 0.0
    %175 = vmatpush.msra.mxu0 0.0
    %176 = vmatpush.msra.mxu0 0.0
    %177 = vmatpush.msra.mxu0 0.0
    %178 = vmatpush.msra.mxu0 0.0
    %179 = vmatpush.msra.mxu0 0.0
    %180 = vmatpush.msra.mxu0 %v154
    %181 = vmatmul.f32.gmra.mxu0 %v160
    %v182 = vpop.f32.mrf.mxu0
    %v183 = vadd.f32 %v157, %v182
    %184 = vmatmul.f32.gmra.mxu0 %v163
    %v185 = vpop.f32.mrf.mxu0
    %v186 = vadd.f32 %v157, %v185
    %187 = vdwg.mxu0
    %v188 = vld [vmem:[%s7] sm:$0x1]
    %v189 = vld [vmem:[%s8] sm:$0x1]
    %v190 = vsel %vm84, %v183, 0.0
    %191 = vadd.xlane.f32.xlu0 %v190
    %v192 = vpop.xlane.xlu0 %191
    %v193 = vsel %vm84, %v186, 0.0
    %194 = vadd.xlane.f32.xlu0 %v193
    %v195 = vpop.xlane.xlu0 %194
    %v196 = vmul.f32 %v192, %v97
    %v197 = vmul.f32 %v195, %v97
    %v198 = vmul.f32 %v183, %v183
    %v199 = vmul.f32 %v186, %v186
    %v200 = vsel %vm84, %v198, 0.0
    %201 = vadd.xlane.f32.xlu0 %v200
    %v202 = vpop.xlane.xlu0 %201
    %v203 = vsel %vm84, %v199, 0.0
    %204 = vadd.xlane.f32.xlu0 %v203
    %v205 = vpop.xlane.xlu0 %204
    %v206 = vmul.f32 %v202, %v97
    %v207 = vmul.f32 %v205, %v97
    %v208 = vmul.f32 %v196, %v196
    %v209 = vmul.f32 %v197, %v197
    %v210 = vsub.f32 %v206, %v208
    %v211 = vsub.f32 %v207, %v209
    %v212 = vmax.f32 %v210, 0.0
    %v213 = vmax.f32 %v211, 0.0
    %v214 = vsub.f32 %v183, %v196
    %v215 = vsub.f32 %v186, %v197
    %v216 = vadd.f32 %v212, 1e-06
    %v217 = vadd.f32 %v213, 1e-06
    %v218 = vrsqrt.pop %v216
    %v219 = vmul.f32 %v218, %v216
    %v220 = vmul.f32 %v219, %v218
    %v221 = vmul.f32 0.5, %v220
    %v222 = vsub.f32 1.5, %v221
    %v223 = vmul.f32 %v218, %v222
    %vm224 = vweird.f32 %v216
    %vm225 = vweird.f32 %v218
    %vm226 = vmor %vm224, %vm225
    %v227 = vsel %vm226, %v218, %v223
    %v228 = vrsqrt.pop %v217
    %v229 = vmul.f32 %v228, %v217
    %v230 = vmul.f32 %v229, %v228
    %v231 = vmul.f32 0.5, %v230
    %v232 = vsub.f32 1.5, %v231
    %v233 = vmul.f32 %v228, %v232
    %vm234 = vweird.f32 %v217
    %vm235 = vweird.f32 %v228
    %vm236 = vmor %vm234, %vm235
    %v237 = vsel %vm236, %v228, %v233
    %v238 = vmul.f32 %v214, %v227
    %v239 = vmul.f32 %v215, %v237
    %v241 = vperm.slane %v188, 0
    %v243 = vmul.f32 %v238, %v241
    %v244 = vmul.f32 %v239, %v241
    %v246 = vperm.slane %v189, 0
    %v248 = vadd.f32 %v243, %v246
    %v249 = vadd.f32 %v244, %v246
    %v250 = vmax.f32 %v248, 0.0
    %v251 = vmax.f32 %v249, 0.0
    %v252 = vld [vmem:[%s9] sm:$0xff]
    %v253 = vld [vmem:[%s10] sm:$0x1]
    %v255 = vperm.slane %v253, 0
    %v258 = vsel %vm84, %v250, 0
    %v261 = vsel %vm84, %v251, 0
    %263 = vmatpush.msra.mxu0 0.0
    %264 = vmatpush.msra.mxu0 0.0
    %265 = vmatpush.msra.mxu0 0.0
    %266 = vmatpush.msra.mxu0 0.0
    %267 = vmatpush.msra.mxu0 0.0
    %268 = vmatpush.msra.mxu0 0.0
    %269 = vmatpush.msra.mxu0 0.0
    %270 = vmatpush.msra.mxu0 0.0
    %271 = vmatpush.msra.mxu0 0.0
    %272 = vmatpush.msra.mxu0 0.0
    %273 = vmatpush.msra.mxu0 0.0
    %274 = vmatpush.msra.mxu0 0.0
    %275 = vmatpush.msra.mxu0 0.0
    %276 = vmatpush.msra.mxu0 0.0
    %277 = vmatpush.msra.mxu0 0.0
    %278 = vmatpush.msra.mxu0 %v252
    %279 = vmatmul.f32.gmra.mxu0 %v258
    %v280 = vpop.f32.mrf.mxu0
    %v281 = vadd.f32 %v255, %v280
    %282 = vmatmul.f32.gmra.mxu0 %v261
    %v283 = vpop.f32.mrf.mxu0
    %v284 = vadd.f32 %v255, %v283
    %285 = vdwg.mxu0
    %v286 = vld [vmem:[%s11] sm:$0x1]
    %v288 = vperm.slane %v286, 0
    %v290 = vmul.f32 %v288, %v281
    %v291 = vmul.f32 %v288, %v284
    %v292 = vadd.f32 %v290, %v42
    %v293 = vadd.f32 %v291, %v43
    %v294 = vmax.f32 %v292, 0.0
    %v295 = vmax.f32 %v293, 0.0
    %296 = vst.msk [vmem:[#allocation2] sm:$0xff] %vm52, %v294
    %297 = vst.msk [vmem:[#allocation2 + $0x8] sm:$0xff] %vm52, %v295
    // Predicated region
    $region50: #{block_forward.1} parent=1 // pred_check
      _
    $region51: #{block_forward.1} parent=1 // pred_check_branch
      %299 = sbr.rel (0) target = $region53
    $region52: #{block_forward.1} parent=1 // pred_region
      %301 = vsyncadd [#allocation3], 0
      %s302 = sshll.u32 [#allocation2], 4
      %s303 = int_to_ptr.vmem [resolvable:$true] %s302
      %s304 = sshll.u32 %s12, 4
      %s305 = int_to_ptr.hbm [resolvable:$true] %s304
      %310 = dma.vmem_to_hbm [thread:$0]  %s303, 256, %s305, [#allocation3], 128, 128, 8
    $region53: #{block_forward.1} parent=1 // pred_fallthru
      _
    // Predicated region
    $region54: #{block_forward.1} parent=1 // pred_check
      _
    $region55: #{block_forward.1} parent=1 // pred_check_branch
      %312 = sbr.rel (0) target = $region57
    $region56: #{block_forward.1} parent=1 // pred_region
      %314 = dma.done [#allocation3], 256
    $region57: #{block_forward.1} parent=1 // pred_fallthru
      _
    %315 = vsyncpa [#allocation3], 1

</llo_original>
